<compile_context>
chip_gen: v6e
topology: v6e:2x2x1
jax: 0.10.0
libtpu: 0.0.40
codegen_flags: <defaults>
</compile_context>

<pallas_src>
import jax
import jax.numpy as jnp
from jax.experimental import pallas as pl
from jax.experimental.pallas import tpu as pltpu

_LANE = 128


def _round_up(x, m):
    return ((x + m - 1) // m) * m


def _padded_row_bytes(cols, itemsize=4):
    # VMEM lane-pads the last dim to 128 lanes of 32-bit words.
    return _round_up(max(cols, 1), _LANE) * itemsize


def _fold_factor(in_size, hidden, n_labels):
    """Batch-fold factor F.

    View x as (B/F, F*in_size) and out as (B/F, F*n_labels) (row-major
    reshapes), with block-diagonal packed weights, so the streamed tiles are
    lane-dense (out exactly 128 lanes when F*n_labels == 128).  F=1 disables
    folding.
    """
    if n_labels >= 1 and _LANE % n_labels == 0:
        f = _LANE // n_labels
        if f > 1 and f * in_size <= 8192 and f * hidden <= 1024:
            return f
    return 1


def _my_xor_kernel(x_ref, p1_ref, p2_ref, o_ref):
    k1 = p1_ref.shape[0] - 1          # (folded) contraction dim of layer 1
    k2 = p2_ref.shape[0] - 1          # (folded) contraction dim of layer 2

    # ---- layer 1 on the MXU: h = x @ W1_bd + b1 ----
    h = jnp.dot(x_ref[...], p1_ref[0:k1, :], preferred_element_type=jnp.float32)
    h = h + p1_ref[k1:k1 + 1, :]

    # ---- sigmoid: exp + exact reciprocal, both land in the EUP slot ----
    h = pl.reciprocal(1.0 + jnp.exp(-h), approx=False)

    # ---- layer 2 ----
    if k2 >= 8:
        # Folded path: K = F*hidden -> worth a second (small) MXU matmul.
        y = jnp.dot(h, p2_ref[0:k2, :], preferred_element_type=jnp.float32)
        y = y + p2_ref[k2:k2 + 1, :]
    else:
        # Unfolded fallback (K == hidden == 2): VPU broadcast multiply-adds,
        # avoids a second MXU push/pop round trip for a depth-2 contraction.
        y = h[:, 0:1] * p2_ref[0:1, :]
        for j in range(1, k2):
            y = y + h[:, j:j + 1] * p2_ref[j:j + 1, :]
        y = y + p2_ref[k2:k2 + 1, :]

    o_ref[...] = y.astype(o_ref.dtype)


def my_xor_forward(x, w1, b1, w2, b2, *, block_batch=32768):
    """Fused forward: sigmoid(x @ w1 + b1) @ w2 + b2.

    x:  (B, in_size) f32
    w1: (in_size, hidden) f32   (transposed vs torch linear1.weight)
    b1: (hidden,) f32
    w2: (hidden, n_labels) f32  (transposed vs torch linear2.weight)
    b2: (n_labels,) f32
    block_batch: target batch-tile size in *original* rows.
    """
    batch, in_size = x.shape
    hidden = w1.shape[1]
    n_labels = w2.shape[1]

    x = x.astype(jnp.float32)
    w1 = w1.astype(jnp.float32)
    b1 = b1.astype(jnp.float32)
    w2 = w2.astype(jnp.float32)
    b2 = b2.astype(jnp.float32)

    # ---- lane densification: block-diagonal weight packing ----
    f = _fold_factor(in_size, hidden, n_labels)
    if f > 1:
        eye = jnp.eye(f, dtype=jnp.float32)
        w1p = jnp.kron(eye, w1)                 # (F*in_size, F*hidden), block-diag
        w2p = jnp.kron(eye, w2)                 # (F*hidden, F*n_labels), block-diag
        b1p = jnp.tile(b1, f)
        b2p = jnp.tile(b2, f)
    else:
        w1p, b1p, w2p, b2p = w1, b1, w2, b2

    k1 = f * in_size
    k2 = f * hidden
    nlf = f * n_labels

    p1 = jnp.concatenate([w1p, b1p[None, :]], axis=0)   # (k1+1, k2)   resident
    p2 = jnp.concatenate([w2p, b2p[None, :]], axis=0)   # (k2+1, nlf)  resident

    # ---- tile sizing over folded rows ----
    rows = _round_up(batch, f) // f
    rows8 = _round_up(rows, 8)
    tb = min(max(8, _round_up(max(block_batch // f, 1), 8)), rows8)

    # Keep the double-buffered VMEM footprint v7x-safe (64 MiB per TensorCore).
    per_row = (2 * _padded_row_bytes(k1)        # x tile, double-buffered
               + 2 * _padded_row_bytes(nlf)     # out tile, double-buffered
               + _padded_row_bytes(k2))         # hidden temporary headroom
    fixed = (2 * _round_up(k1 + 1, 8) * _padded_row_bytes(k2)
             + 2 * _round_up(k2 + 1, 8) * _padded_row_bytes(nlf))
    tile_budget = 40 * 1024 * 1024
    tb_cap = max(8, ((tile_budget - fixed) // per_row) // 8 * 8)
    tb = min(tb, tb_cap)

    # Keep >= ~4 grid steps when the batch allows it: v7x megacore split of the
    # "parallel" axis and DMA/compute overlap both need >1 step per core.
    min_steps = 4
    if rows8 // tb < min_steps and rows8 >= min_steps * 8:
        tb = max(8, _round_up(-(-rows8 // min_steps), 8))

    padded_rows = _round_up(rows, tb)
    total = padded_rows * f
    if total != batch:
        x = jnp.pad(x, ((0, total - batch), (0, 0)))
    xf = x.reshape(padded_rows, k1)             # pure row-major reshape in HBM

    # Explicit scoped-VMEM limit: above the 16/32 MiB defaults when large tiles
    # need it, never above v7x's 64 MiB physical per-TC VMEM.
    vmem_limit = int(min(64 * 1024 * 1024,
                         max(32 * 1024 * 1024, fixed + tb * per_row + (4 << 20))))

    # True (logical) cost: this kernel is HBM-bound on the x stream.
    cost = pl.CostEstimate(
        flops=2 * total * in_size * hidden + 2 * total * hidden * n_labels,
        transcendentals=total * hidden,
        bytes_accessed=4 * (total * in_size + total * n_labels
                            + int(p1.size) + int(p2.size)),
    )

    out = pl.pallas_call(
        _my_xor_kernel,
        out_shape=jax.ShapeDtypeStruct((padded_rows, nlf), jnp.float32),
        grid=(padded_rows // tb,),
        in_specs=[
            # x: streamed.  Default double-buffering; switch to
            # pipeline_mode=pl.Buffered(3) only if profiling shows exposed DMA.
            pl.BlockSpec((tb, k1), lambda i: (i, 0)),
            pl.BlockSpec((k1 + 1, k2), lambda i: (0, 0)),     # [W1;b1]: resident
            pl.BlockSpec((k2 + 1, nlf), lambda i: (0, 0)),    # [W2;b2]: resident
        ],
        out_specs=pl.BlockSpec((tb, nlf), lambda i: (i, 0)),
        compiler_params=pltpu.CompilerParams(
            dimension_semantics=("parallel",),    # megacore split on v7x
            vmem_limit_bytes=vmem_limit,
        ),
        cost_estimate=cost,
    )(xf, p1, p2)

    out = out.reshape(total, n_labels)
    return out[:batch] if total != batch else out


def _ref_forward(x, w1, b1, w2, b2):
    h = jax.nn.sigmoid(x @ w1 + b1)
    return h @ w2 + b2


def _make_inputs(key, batch, in_size, n_labels):
    k_x, k_w1, k_b1, k_w2, k_b2 = jax.random.split(key, 5)
    lim1 = 1.0 / jnp.sqrt(in_size)
    lim2 = 1.0 / jnp.sqrt(2.0)
    x = jax.random.normal(k_x, (batch, in_size), dtype=jnp.float32)
    w1 = jax.random.uniform(k_w1, (in_size, 2), jnp.float32, -lim1, lim1)
    b1 = jax.random.uniform(k_b1, (2,), jnp.float32, -lim1, lim1)
    w2 = jax.random.uniform(k_w2, (2, n_labels), jnp.float32, -lim2, lim2)
    b2 = jax.random.uniform(k_b2, (n_labels,), jnp.float32, -lim2, lim2)
    return x, w1, b1, w2, b2


if __name__ == "__main__":
    key = jax.random.PRNGKey(0)
    k0, k1, k2 = jax.random.split(key, 3)

    # 1) Module-sized case: in_size=32, n_labels=4, batch=20 (not a tile
    #    multiple -> exercises fold padding), default large-tile config.
    x, w1, b1, w2, b2 = _make_inputs(k0, 20, 32, 4)
    out = my_xor_forward(x, w1, b1, w2, b2)
    jax.block_until_ready(out)
    ref = _ref_forward(x, w1, b1, w2, b2)
    assert out.shape == (20, 4)
    assert jnp.allclose(out, ref, atol=2e-3, rtol=2e-3), "mismatch (case 1)"

    # 2) Larger batch -> folded multi-step grid (>= 4 pipelined steps).
    x, w1, b1, w2, b2 = _make_inputs(k1, 1000, 32, 4)
    out = my_xor_forward(x, w1, b1, w2, b2)
    jax.block_until_ready(out)
    ref = _ref_forward(x, w1, b1, w2, b2)
    assert out.shape == (1000, 4)
    assert jnp.allclose(out, ref, atol=2e-3, rtol=2e-3), "mismatch (case 2)"

    # 3) n_labels that does not divide 128 -> F=1 fallback path (VPU layer 2),
    #    small block_batch to exercise a multi-step grid with row padding.
    x, w1, b1, w2, b2 = _make_inputs(k2, 20, 32, 3)
    out = my_xor_forward(x, w1, b1, w2, b2, block_batch=8)
    jax.block_until_ready(out)
    ref = _ref_forward(x, w1, b1, w2, b2)
    assert out.shape == (20, 3)
    assert jnp.allclose(out, ref, atol=2e-3, rtol=2e-3), "mismatch (case 3)"

    print("KERNEL_OK")
</pallas_src>

<mosaic_0001>
module attributes {stable_mosaic.version = 11 : i64} {
  func.func @_my_xor_kernel(%arg0: i32, %arg1: memref<8x1024xf32, #tpu.memory_space<vmem>>, %arg2: memref<1025x64xf32, #tpu.memory_space<vmem>>, %arg3: memref<65x128xf32, #tpu.memory_space<vmem>>, %arg4: memref<8x128xf32, #tpu.memory_space<vmem>>) attributes {dimension_semantics = [#tpu.dimension_semantics<parallel>], iteration_bounds = array<i64: 1>, scalar_prefetch = 0 : i64, scratch_operands = 0 : i64, tpu.core_type = #tpu.core_type<tc>, window_params = [{transform_indices = @transform_0, window_bounds = array<i64: 8, 1024>}, {pipeline_mode = #tpu.pipeline_mode<synchronous>, transform_indices = @transform_1, window_bounds = array<i64: 1025, 64>}, {pipeline_mode = #tpu.pipeline_mode<synchronous>, transform_indices = @transform_2, window_bounds = array<i64: 65, 128>}, {transform_indices = @transform_3, window_bounds = array<i64: 8, 128>}]} {
    %c0 = arith.constant 0 : index
    %c0_0 = arith.constant 0 : index
    %0 = vector.load %arg1[%c0, %c0_0] : memref<8x1024xf32, #tpu.memory_space<vmem>>, vector<8x1024xf32>
    %c0_1 = arith.constant 0 : index
    %c0_2 = arith.constant 0 : index
    %1 = vector.load %arg2[%c0_1, %c0_2] : memref<1025x64xf32, #tpu.memory_space<vmem>>, vector<1024x64xf32>
    %cst = arith.constant dense<0.000000e+00> : vector<8x64xf32>
    %2 = tpu.matmul %0, %1, %cst {dimension_numbers = #tpu.dot_dimension_numbers<[1], [0], [0], [1], [0, 0, 1, 1], [], []>} : vector<8x1024xf32>, vector<1024x64xf32>, vector<8x64xf32> -> vector<8x64xf32>
    %c1024 = arith.constant 1024 : index
    %c0_3 = arith.constant 0 : index
    %3 = vector.load %arg2[%c1024, %c0_3] : memref<1025x64xf32, #tpu.memory_space<vmem>>, vector<1x64xf32>
    %4 = vector.broadcast %3 : vector<1x64xf32> to vector<8x64xf32>
    %5 = arith.addf %2, %4 : vector<8x64xf32>
    %cst_4 = arith.constant 0.000000e+00 : f32
    %6 = vector.broadcast %cst_4 : f32 to vector<8x64xf32>
    %7 = arith.subf %6, %5 : vector<8x64xf32>
    %8 = math.exp %7 : vector<8x64xf32>
    %cst_5 = arith.constant 1.000000e+00 : f32
    %9 = vector.broadcast %cst_5 : f32 to vector<8x64xf32>
    %10 = arith.addf %9, %8 : vector<8x64xf32>
    %11 = tpu.reciprocal %10 : vector<8x64xf32> -> vector<8x64xf32>
    %c0_6 = arith.constant 0 : index
    %c0_7 = arith.constant 0 : index
    %12 = vector.load %arg3[%c0_6, %c0_7] : memref<65x128xf32, #tpu.memory_space<vmem>>, vector<64x128xf32>
    %cst_8 = arith.constant dense<0.000000e+00> : vector<8x128xf32>
    %13 = tpu.matmul %11, %12, %cst_8 {dimension_numbers = #tpu.dot_dimension_numbers<[1], [0], [0], [1], [0, 0, 1, 1], [], []>} : vector<8x64xf32>, vector<64x128xf32>, vector<8x128xf32> -> vector<8x128xf32>
    %c64 = arith.constant 64 : index
    %c0_9 = arith.constant 0 : index
    %14 = vector.load %arg3[%c64, %c0_9] : memref<65x128xf32, #tpu.memory_space<vmem>>, vector<1x128xf32>
    %15 = vector.broadcast %14 : vector<1x128xf32> to vector<8x128xf32>
    %16 = arith.addf %13, %15 : vector<8x128xf32>
    %c0_10 = arith.constant 0 : index
    %c0_11 = arith.constant 0 : index
    %17 = vector.load %arg4[%c0_10, %c0_11] : memref<8x128xf32, #tpu.memory_space<vmem>>, vector<8x128xf32>
    tpu.vector_store %arg4[%c0_10, %c0_11], %16 {strides = array<i32>} : memref<8x128xf32, #tpu.memory_space<vmem>>, vector<8x128xf32>,
    return
  }
  func.func @transform_0(%arg0: i32) -> (i32, i32) {
    %c0_i32 = arith.constant 0 : i32
    %c0_i32_0 = arith.constant 0 : i32
    return %arg0, %c0_i32 : i32, i32
  }
  func.func @transform_1(%arg0: i32) -> (i32, i32) {
    %c0_i32 = arith.constant 0 : i32
    %c0_i32_0 = arith.constant 0 : i32
    %c0_i32_1 = arith.constant 0 : i32
    return %c0_i32, %c0_i32_0 : i32, i32
  }
  func.func @transform_2(%arg0: i32) -> (i32, i32) {
    %c0_i32 = arith.constant 0 : i32
    %c0_i32_0 = arith.constant 0 : i32
    %c0_i32_1 = arith.constant 0 : i32
    return %c0_i32, %c0_i32_0 : i32, i32
  }
  func.func @transform_3(%arg0: i32) -> (i32, i32) {
    %c0_i32 = arith.constant 0 : i32
    %c0_i32_0 = arith.constant 0 : i32
    return %arg0, %c0_i32 : i32, i32
  }
}

</mosaic_0001>

<llo_original>
// kernel: tpu_custom_call.1
$region0: #{tpu_custom_call.1}
  #allocation0 [shape = 'u32[]', space=smem, size = 0x4, offset = 0x4, fixed_abs, tag = 'smem constant byte address 0x4 - core index']
  #allocation1 [shape = 'u32[144,128]{1,0:T(1,128)}', space=vmem, size = 0x12000, scoped, tag = 'internal scratch']
  %s0 = inlined_call_operand.vmem [shape: f32[8,1024], index: 0, kind: input, shape index: {}]
  %s1 = inlined_call_operand.vmem [shape: f32[1025,64], index: 1, kind: input, shape index: {}]
  %s2 = inlined_call_operand.vmem [shape: f32[65,128], index: 2, kind: input, shape index: {}]
  %s3 = inlined_call_operand.hbm [shape: f32[8,128], index: 3, kind: output, shape index: {}]
  %s4 = sld [smem:[#allocation0]]
  $region22: #{tpu_custom_call.1} parent=0
    _
  %s6 = ssub.s32 1, %s4
  %s7 = scalar_select 0, %s6, %s4
  $region1: #{tpu_custom_call.1} parent=0
    #allocation2 [shape = 'u8[4096]{0}', space=vmem, size = 0x1000, scoped, tag = 'output window, operand 0, single buffered']
    #allocation3 [shape = 's32[1]{0}', space=sflag, size = 0x4, scoped, tag = 'scoped memory for tpu_custom_call.1']
    %8 = vsyncpa [#allocation3], 0
    // Predicated region
    $region2: #{tpu_custom_call.1} parent=1 // pred_check
      _
    $region3: #{tpu_custom_call.1} parent=1 // pred_check_branch
      %10 = sbr.rel (0) target = $region5
    $region4: #{tpu_custom_call.1} parent=1 // pred_region
      _
    $region5: #{tpu_custom_call.1} parent=1 // pred_fallthru
      _
    // Predicated region
    $region6: #{tpu_custom_call.1} parent=1 // pred_check
      _
    $region7: #{tpu_custom_call.1} parent=1 // pred_check_branch
      %12 = sbr.rel (0) target = $region9
    $region8: #{tpu_custom_call.1} parent=1 // pred_region
      _
    $region9: #{tpu_custom_call.1} parent=1 // pred_fallthru
      _
    // Predicated region
    $region10: #{tpu_custom_call.1} parent=1 // pred_check
      _
    $region11: #{tpu_custom_call.1} parent=1 // pred_check_branch
      %14 = sbr.rel (0) target = $region13
    $region12: #{tpu_custom_call.1} parent=1 // pred_region
      _
    $region13: #{tpu_custom_call.1} parent=1 // pred_fallthru
      _
    %v15 = vld [vmem:[%s0] sm:$0xff]
    %v16 = vld [vmem:[%s0 + $0x8] sm:$0xff]
    %v17 = vld [vmem:[%s0 + $0x10] sm:$0xff]
    %v18 = vld [vmem:[%s0 + $0x18] sm:$0xff]
    %v19 = vld [vmem:[%s0 + $0x20] sm:$0xff]
    %v20 = vld [vmem:[%s0 + $0x28] sm:$0xff]
    %v21 = vld [vmem:[%s0 + $0x30] sm:$0xff]
    %v22 = vld [vmem:[%s0 + $0x38] sm:$0xff]
    %v23 = vld [vmem:[%s1] sm:$0xff]
    %v24 = vld [vmem:[%s1 + $0x8] sm:$0xff]
    %v25 = vld [vmem:[%s1 + $0x10] sm:$0xff]
    %v26 = vld [vmem:[%s1 + $0x18] sm:$0xff]
    %v27 = vld [vmem:[%s1 + $0x20] sm:$0xff]
    %v28 = vld [vmem:[%s1 + $0x28] sm:$0xff]
    %v29 = vld [vmem:[%s1 + $0x30] sm:$0xff]
    %v30 = vld [vmem:[%s1 + $0x38] sm:$0xff]
    %v31 = vld [vmem:[%s1 + $0x40] sm:$0xff]
    %v32 = vld [vmem:[%s1 + $0x48] sm:$0xff]
    %v33 = vld [vmem:[%s1 + $0x50] sm:$0xff]
    %v34 = vld [vmem:[%s1 + $0x58] sm:$0xff]
    %v35 = vld [vmem:[%s1 + $0x60] sm:$0xff]
    %v36 = vld [vmem:[%s1 + $0x68] sm:$0xff]
    %v37 = vld [vmem:[%s1 + $0x70] sm:$0xff]
    %v38 = vld [vmem:[%s1 + $0x78] sm:$0xff]
    %v39 = vld [vmem:[%s1 + $0x80] sm:$0xff]
    %v40 = vld [vmem:[%s1 + $0x88] sm:$0xff]
    %v41 = vld [vmem:[%s1 + $0x90] sm:$0xff]
    %v42 = vld [vmem:[%s1 + $0x98] sm:$0xff]
    %v43 = vld [vmem:[%s1 + $0xa0] sm:$0xff]
    %v44 = vld [vmem:[%s1 + $0xa8] sm:$0xff]
    %v45 = vld [vmem:[%s1 + $0xb0] sm:$0xff]
    %v46 = vld [vmem:[%s1 + $0xb8] sm:$0xff]
    %v47 = vld [vmem:[%s1 + $0xc0] sm:$0xff]
    %v48 = vld [vmem:[%s1 + $0xc8] sm:$0xff]
    %v49 = vld [vmem:[%s1 + $0xd0] sm:$0xff]
    %v50 = vld [vmem:[%s1 + $0xd8] sm:$0xff]
    %v51 = vld [vmem:[%s1 + $0xe0] sm:$0xff]
    %v52 = vld [vmem:[%s1 + $0xe8] sm:$0xff]
    %v53 = vld [vmem:[%s1 + $0xf0] sm:$0xff]
    %v54 = vld [vmem:[%s1 + $0xf8] sm:$0xff]
    %v55 = vld [vmem:[%s1 + $0x100] sm:$0xff]
    %v56 = vld [vmem:[%s1 + $0x108] sm:$0xff]
    %v57 = vld [vmem:[%s1 + $0x110] sm:$0xff]
    %v58 = vld [vmem:[%s1 + $0x118] sm:$0xff]
    %v59 = vld [vmem:[%s1 + $0x120] sm:$0xff]
    %v60 = vld [vmem:[%s1 + $0x128] sm:$0xff]
    %v61 = vld [vmem:[%s1 + $0x130] sm:$0xff]
    %v62 = vld [vmem:[%s1 + $0x138] sm:$0xff]
    %v63 = vld [vmem:[%s1 + $0x140] sm:$0xff]
    %v64 = vld [vmem:[%s1 + $0x148] sm:$0xff]
    %v65 = vld [vmem:[%s1 + $0x150] sm:$0xff]
    %v66 = vld [vmem:[%s1 + $0x158] sm:$0xff]
    %v67 = vld [vmem:[%s1 + $0x160] sm:$0xff]
    %v68 = vld [vmem:[%s1 + $0x168] sm:$0xff]
    %v69 = vld [vmem:[%s1 + $0x170] sm:$0xff]
    %v70 = vld [vmem:[%s1 + $0x178] sm:$0xff]
    %v71 = vld [vmem:[%s1 + $0x180] sm:$0xff]
    %v72 = vld [vmem:[%s1 + $0x188] sm:$0xff]
    %v73 = vld [vmem:[%s1 + $0x190] sm:$0xff]
    %v74 = vld [vmem:[%s1 + $0x198] sm:$0xff]
    %v75 = vld [vmem:[%s1 + $0x1a0] sm:$0xff]
    %v76 = vld [vmem:[%s1 + $0x1a8] sm:$0xff]
    %v77 = vld [vmem:[%s1 + $0x1b0] sm:$0xff]
    %v78 = vld [vmem:[%s1 + $0x1b8] sm:$0xff]
    %v79 = vld [vmem:[%s1 + $0x1c0] sm:$0xff]
    %v80 = vld [vmem:[%s1 + $0x1c8] sm:$0xff]
    %v81 = vld [vmem:[%s1 + $0x1d0] sm:$0xff]
    %v82 = vld [vmem:[%s1 + $0x1d8] sm:$0xff]
    %v83 = vld [vmem:[%s1 + $0x1e0] sm:$0xff]
    %v84 = vld [vmem:[%s1 + $0x1e8] sm:$0xff]
    %v85 = vld [vmem:[%s1 + $0x1f0] sm:$0xff]
    %v86 = vld [vmem:[%s1 + $0x1f8] sm:$0xff]
    %v87 = vld [vmem:[%s1 + $0x200] sm:$0xff]
    %v88 = vld [vmem:[%s1 + $0x208] sm:$0xff]
    %v89 = vld [vmem:[%s1 + $0x210] sm:$0xff]
    %v90 = vld [vmem:[%s1 + $0x218] sm:$0xff]
    %v91 = vld [vmem:[%s1 + $0x220] sm:$0xff]
    %v92 = vld [vmem:[%s1 + $0x228] sm:$0xff]
    %v93 = vld [vmem:[%s1 + $0x230] sm:$0xff]
    %v94 = vld [vmem:[%s1 + $0x238] sm:$0xff]
    %v95 = vld [vmem:[%s1 + $0x240] sm:$0xff]
    %v96 = vld [vmem:[%s1 + $0x248] sm:$0xff]
    %v97 = vld [vmem:[%s1 + $0x250] sm:$0xff]
    %v98 = vld [vmem:[%s1 + $0x258] sm:$0xff]
    %v99 = vld [vmem:[%s1 + $0x260] sm:$0xff]
    %v100 = vld [vmem:[%s1 + $0x268] sm:$0xff]
    %v101 = vld [vmem:[%s1 + $0x270] sm:$0xff]
    %v102 = vld [vmem:[%s1 + $0x278] sm:$0xff]
    %v103 = vld [vmem:[%s1 + $0x280] sm:$0xff]
    %v104 = vld [vmem:[%s1 + $0x288] sm:$0xff]
    %v105 = vld [vmem:[%s1 + $0x290] sm:$0xff]
    %v106 = vld [vmem:[%s1 + $0x298] sm:$0xff]
    %v107 = vld [vmem:[%s1 + $0x2a0] sm:$0xff]
    %v108 = vld [vmem:[%s1 + $0x2a8] sm:$0xff]
    %v109 = vld [vmem:[%s1 + $0x2b0] sm:$0xff]
    %v110 = vld [vmem:[%s1 + $0x2b8] sm:$0xff]
    %v111 = vld [vmem:[%s1 + $0x2c0] sm:$0xff]
    %v112 = vld [vmem:[%s1 + $0x2c8] sm:$0xff]
    %v113 = vld [vmem:[%s1 + $0x2d0] sm:$0xff]
    %v114 = vld [vmem:[%s1 + $0x2d8] sm:$0xff]
    %v115 = vld [vmem:[%s1 + $0x2e0] sm:$0xff]
    %v116 = vld [vmem:[%s1 + $0x2e8] sm:$0xff]
    %v117 = vld [vmem:[%s1 + $0x2f0] sm:$0xff]
    %v118 = vld [vmem:[%s1 + $0x2f8] sm:$0xff]
    %v119 = vld [vmem:[%s1 + $0x300] sm:$0xff]
    %v120 = vld [vmem:[%s1 + $0x308] sm:$0xff]
    %v121 = vld [vmem:[%s1 + $0x310] sm:$0xff]
    %v122 = vld [vmem:[%s1 + $0x318] sm:$0xff]
    %v123 = vld [vmem:[%s1 + $0x320] sm:$0xff]
    %v124 = vld [vmem:[%s1 + $0x328] sm:$0xff]
    %v125 = vld [vmem:[%s1 + $0x330] sm:$0xff]
    %v126 = vld [vmem:[%s1 + $0x338] sm:$0xff]
    %v127 = vld [vmem:[%s1 + $0x340] sm:$0xff]
    %v128 = vld [vmem:[%s1 + $0x348] sm:$0xff]
    %v129 = vld [vmem:[%s1 + $0x350] sm:$0xff]
    %v130 = vld [vmem:[%s1 + $0x358] sm:$0xff]
    %v131 = vld [vmem:[%s1 + $0x360] sm:$0xff]
    %v132 = vld [vmem:[%s1 + $0x368] sm:$0xff]
    %v133 = vld [vmem:[%s1 + $0x370] sm:$0xff]
    %v134 = vld [vmem:[%s1 + $0x378] sm:$0xff]
    %v135 = vld [vmem:[%s1 + $0x380] sm:$0xff]
    %v136 = vld [vmem:[%s1 + $0x388] sm:$0xff]
    %v137 = vld [vmem:[%s1 + $0x390] sm:$0xff]
    %v138 = vld [vmem:[%s1 + $0x398] sm:$0xff]
    %v139 = vld [vmem:[%s1 + $0x3a0] sm:$0xff]
    %v140 = vld [vmem:[%s1 + $0x3a8] sm:$0xff]
    %v141 = vld [vmem:[%s1 + $0x3b0] sm:$0xff]
    %v142 = vld [vmem:[%s1 + $0x3b8] sm:$0xff]
    %v143 = vld [vmem:[%s1 + $0x3c0] sm:$0xff]
    %v144 = vld [vmem:[%s1 + $0x3c8] sm:$0xff]
    %v145 = vld [vmem:[%s1 + $0x3d0] sm:$0xff]
    %v146 = vld [vmem:[%s1 + $0x3d8] sm:$0xff]
    %v147 = vld [vmem:[%s1 + $0x3e0] sm:$0xff]
    %v148 = vld [vmem:[%s1 + $0x3e8] sm:$0xff]
    %v149 = vld [vmem:[%s1 + $0x3f0] sm:$0xff]
    %v150 = vld [vmem:[%s1 + $0x3f8] sm:$0xff]
    %v151 = vld [vmem:[%s1 + $0x400] sm:$0x1]
    %v152 = vlaneseq
    %v153 = vshrl.u32 %v152, 7
    %v154 = vsub.s32 0, %v153
    %v155 = vrot.slane %v151, %v154
    %156 = vmatprep.subr.mxu0 0.0
    %157 = vmatpush1.msra.mxu0 %v38
    %158 = vmatprep.subr.mxu0 0.0
    %159 = vmatpush1.msra.mxu0 %v37
    %160 = vmatprep.subr.mxu0 0.0
    %161 = vmatpush1.msra.mxu0 %v36
    %162 = vmatprep.subr.mxu0 0.0
    %163 = vmatpush1.msra.mxu0 %v35
    %164 = vmatprep.subr.mxu0 0.0
    %165 = vmatpush1.msra.mxu0 %v34
    %166 = vmatprep.subr.mxu0 0.0
    %167 = vmatpush1.msra.mxu0 %v33
    %168 = vmatprep.subr.mxu0 0.0
    %169 = vmatpush1.msra.mxu0 %v32
    %170 = vmatprep.subr.mxu0 0.0
    %171 = vmatpush1.msra.mxu0 %v31
    %172 = vmatprep.subr.mxu0 0.0
    %173 = vmatpush1.msra.mxu0 %v30
    %174 = vmatprep.subr.mxu0 0.0
    %175 = vmatpush1.msra.mxu0 %v29
    %176 = vmatprep.subr.mxu0 0.0
    %177 = vmatpush1.msra.mxu0 %v28
    %178 = vmatprep.subr.mxu0 0.0
    %179 = vmatpush1.msra.mxu0 %v27
    %180 = vmatprep.subr.mxu0 0.0
    %181 = vmatpush1.msra.mxu0 %v26
    %182 = vmatprep.subr.mxu0 0.0
    %183 = vmatpush1.msra.mxu0 %v25
    %184 = vmatprep.subr.mxu0 0.0
    %185 = vmatpush1.msra.mxu0 %v24
    %186 = vmatprep.subr.mxu0 0.0
    %187 = vmatpush1.msra.mxu0 %v23
    %188 = vmatprep.subr.mxu0 0.0
    %189 = vmatpush2.msra.mxu0 %v54
    %190 = vmatprep.subr.mxu0 0.0
    %191 = vmatpush2.msra.mxu0 %v53
    %192 = vmatprep.subr.mxu0 0.0
    %193 = vmatpush2.msra.mxu0 %v52
    %194 = vmatprep.subr.mxu0 0.0
    %195 = vmatpush2.msra.mxu0 %v51
    %196 = vmatprep.subr.mxu0 0.0
    %197 = vmatpush2.msra.mxu0 %v50
    %198 = vmatprep.subr.mxu0 0.0
    %199 = vmatpush2.msra.mxu0 %v49
    %200 = vmatprep.subr.mxu0 0.0
    %201 = vmatpush2.msra.mxu0 %v48
    %202 = vmatprep.subr.mxu0 0.0
    %203 = vmatpush2.msra.mxu0 %v47
    %204 = vmatprep.subr.mxu0 0.0
    %205 = vmatpush2.msra.mxu0 %v46
    %206 = vmatprep.subr.mxu0 0.0
    %207 = vmatpush2.msra.mxu0 %v45
    %208 = vmatprep.subr.mxu0 0.0
    %209 = vmatpush2.msra.mxu0 %v44
    %210 = vmatprep.subr.mxu0 0.0
    %211 = vmatpush2.msra.mxu0 %v43
    %212 = vmatprep.subr.mxu0 0.0
    %213 = vmatpush2.msra.mxu0 %v42
    %214 = vmatprep.subr.mxu0 0.0
    %215 = vmatpush2.msra.mxu0 %v41
    %216 = vmatprep.subr.mxu0 0.0
    %217 = vmatpush2.msra.mxu0 %v40
    %218 = vmatprep.subr.mxu0 0.0
    %219 = vmatpush2.msra.mxu0 %v39
    %220 = vmatprep.mubr.f32.mxu0 %v16
    %221 = vmatmul.mubr.f32.gmra.mxu0 %v15
    %v222 = vpop.f32.mrf.mxu0
    %v223 = vadd.f32 %v155, %v222
    %v224 = vpop.f32.mrf.mxu0
    %225 = vdwg.mxu0
    %226 = vmatprep.subr.mxu0 0.0
    %227 = vmatpush1.msra.mxu0 %v70
    %228 = vmatprep.subr.mxu0 0.0
    %229 = vmatpush1.msra.mxu0 %v69
    %230 = vmatprep.subr.mxu0 0.0
    %231 = vmatpush1.msra.mxu0 %v68
    %232 = vmatprep.subr.mxu0 0.0
    %233 = vmatpush1.msra.mxu0 %v67
    %234 = vmatprep.subr.mxu0 0.0
    %235 = vmatpush1.msra.mxu0 %v66
    %236 = vmatprep.subr.mxu0 0.0
    %237 = vmatpush1.msra.mxu0 %v65
    %238 = vmatprep.subr.mxu0 0.0
    %239 = vmatpush1.msra.mxu0 %v64
    %240 = vmatprep.subr.mxu0 0.0
    %241 = vmatpush1.msra.mxu0 %v63
    %242 = vmatprep.subr.mxu0 0.0
    %243 = vmatpush1.msra.mxu0 %v62
    %244 = vmatprep.subr.mxu0 0.0
    %245 = vmatpush1.msra.mxu0 %v61
    %246 = vmatprep.subr.mxu0 0.0
    %247 = vmatpush1.msra.mxu0 %v60
    %248 = vmatprep.subr.mxu0 0.0
    %249 = vmatpush1.msra.mxu0 %v59
    %250 = vmatprep.subr.mxu0 0.0
    %251 = vmatpush1.msra.mxu0 %v58
    %252 = vmatprep.subr.mxu0 0.0
    %253 = vmatpush1.msra.mxu0 %v57
    %254 = vmatprep.subr.mxu0 0.0
    %255 = vmatpush1.msra.mxu0 %v56
    %256 = vmatprep.subr.mxu0 0.0
    %257 = vmatpush1.msra.mxu0 %v55
    %258 = vmatprep.subr.mxu0 0.0
    %259 = vmatpush2.msra.mxu0 %v86
    %260 = vmatprep.subr.mxu0 0.0
    %261 = vmatpush2.msra.mxu0 %v85
    %262 = vmatprep.subr.mxu0 0.0
    %263 = vmatpush2.msra.mxu0 %v84
    %264 = vmatprep.subr.mxu0 0.0
    %265 = vmatpush2.msra.mxu0 %v83
    %266 = vmatprep.subr.mxu0 0.0
    %267 = vmatpush2.msra.mxu0 %v82
    %268 = vmatprep.subr.mxu0 0.0
    %269 = vmatpush2.msra.mxu0 %v81
    %270 = vmatprep.subr.mxu0 0.0
    %271 = vmatpush2.msra.mxu0 %v80
    %272 = vmatprep.subr.mxu0 0.0
    %273 = vmatpush2.msra.mxu0 %v79
    %274 = vmatprep.subr.mxu0 0.0
    %275 = vmatpush2.msra.mxu0 %v78
    %276 = vmatprep.subr.mxu0 0.0
    %277 = vmatpush2.msra.mxu0 %v77
    %278 = vmatprep.subr.mxu0 0.0
    %279 = vmatpush2.msra.mxu0 %v76
    %280 = vmatprep.subr.mxu0 0.0
    %281 = vmatpush2.msra.mxu0 %v75
    %282 = vmatprep.subr.mxu0 0.0
    %283 = vmatpush2.msra.mxu0 %v74
    %284 = vmatprep.subr.mxu0 0.0
    %285 = vmatpush2.msra.mxu0 %v73
    %286 = vmatprep.subr.mxu0 0.0
    %287 = vmatpush2.msra.mxu0 %v72
    %288 = vmatprep.subr.mxu0 0.0
    %289 = vmatpush2.msra.mxu0 %v71
    %290 = vmatprep.mubr.f32.mxu0 %v18
    %291 = vmatmul.mubr.f32.gmra.mxu0 %v17
    %v292 = vpop.f32.mrf.mxu0
    %v293 = vadd.f32 %v223, %v292
    %v294 = vpop.f32.mrf.mxu0
    %295 = vdwg.mxu0
    %296 = vmatprep.subr.mxu0 0.0
    %297 = vmatpush1.msra.mxu0 %v102
    %298 = vmatprep.subr.mxu0 0.0
    %299 = vmatpush1.msra.mxu0 %v101
    %300 = vmatprep.subr.mxu0 0.0
    %301 = vmatpush1.msra.mxu0 %v100
    %302 = vmatprep.subr.mxu0 0.0
    %303 = vmatpush1.msra.mxu0 %v99
    %304 = vmatprep.subr.mxu0 0.0
    %305 = vmatpush1.msra.mxu0 %v98
    %306 = vmatprep.subr.mxu0 0.0
    %307 = vmatpush1.msra.mxu0 %v97
    %308 = vmatprep.subr.mxu0 0.0
    %309 = vmatpush1.msra.mxu0 %v96
    %310 = vmatprep.subr.mxu0 0.0
    %311 = vmatpush1.msra.mxu0 %v95
    %312 = vmatprep.subr.mxu0 0.0
    %313 = vmatpush1.msra.mxu0 %v94
    %314 = vmatprep.subr.mxu0 0.0
    %315 = vmatpush1.msra.mxu0 %v93
    %316 = vmatprep.subr.mxu0 0.0
    %317 = vmatpush1.msra.mxu0 %v92
    %318 = vmatprep.subr.mxu0 0.0
    %319 = vmatpush1.msra.mxu0 %v91
    %320 = vmatprep.subr.mxu0 0.0
    %321 = vmatpush1.msra.mxu0 %v90
    %322 = vmatprep.subr.mxu0 0.0
    %323 = vmatpush1.msra.mxu0 %v89
    %324 = vmatprep.subr.mxu0 0.0
    %325 = vmatpush1.msra.mxu0 %v88
    %326 = vmatprep.subr.mxu0 0.0
    %327 = vmatpush1.msra.mxu0 %v87
    %328 = vmatprep.subr.mxu0 0.0
    %329 = vmatpush2.msra.mxu0 %v118
    %330 = vmatprep.subr.mxu0 0.0
    %331 = vmatpush2.msra.mxu0 %v117
    %332 = vmatprep.subr.mxu0 0.0
    %333 = vmatpush2.msra.mxu0 %v116
    %334 = vmatprep.subr.mxu0 0.0
    %335 = vmatpush2.msra.mxu0 %v115
    %336 = vmatprep.subr.mxu0 0.0
    %337 = vmatpush2.msra.mxu0 %v114
    %338 = vmatprep.subr.mxu0 0.0
    %339 = vmatpush2.msra.mxu0 %v113
    %340 = vmatprep.subr.mxu0 0.0
    %341 = vmatpush2.msra.mxu0 %v112
    %342 = vmatprep.subr.mxu0 0.0
    %343 = vmatpush2.msra.mxu0 %v111
    %344 = vmatprep.subr.mxu0 0.0
    %345 = vmatpush2.msra.mxu0 %v110
    %346 = vmatprep.subr.mxu0 0.0
    %347 = vmatpush2.msra.mxu0 %v109
    %348 = vmatprep.subr.mxu0 0.0
    %349 = vmatpush2.msra.mxu0 %v108
    %350 = vmatprep.subr.mxu0 0.0
    %351 = vmatpush2.msra.mxu0 %v107
    %352 = vmatprep.subr.mxu0 0.0
    %353 = vmatpush2.msra.mxu0 %v106
    %354 = vmatprep.subr.mxu0 0.0
    %355 = vmatpush2.msra.mxu0 %v105
    %356 = vmatprep.subr.mxu0 0.0
    %357 = vmatpush2.msra.mxu0 %v104
    %358 = vmatprep.subr.mxu0 0.0
    %359 = vmatpush2.msra.mxu0 %v103
    %360 = vmatprep.mubr.f32.mxu0 %v20
    %361 = vmatmul.mubr.f32.gmra.mxu0 %v19
    %v362 = vpop.f32.mrf.mxu0
    %v363 = vadd.f32 %v293, %v362
    %v364 = vpop.f32.mrf.mxu0
    %365 = vdwg.mxu0
    %366 = vmatprep.subr.mxu0 0.0
    %367 = vmatpush1.msra.mxu0 %v134
    %368 = vmatprep.subr.mxu0 0.0
    %369 = vmatpush1.msra.mxu0 %v133
    %370 = vmatprep.subr.mxu0 0.0
    %371 = vmatpush1.msra.mxu0 %v132
    %372 = vmatprep.subr.mxu0 0.0
    %373 = vmatpush1.msra.mxu0 %v131
    %374 = vmatprep.subr.mxu0 0.0
    %375 = vmatpush1.msra.mxu0 %v130
    %376 = vmatprep.subr.mxu0 0.0
    %377 = vmatpush1.msra.mxu0 %v129
    %378 = vmatprep.subr.mxu0 0.0
    %379 = vmatpush1.msra.mxu0 %v128
    %380 = vmatprep.subr.mxu0 0.0
    %381 = vmatpush1.msra.mxu0 %v127
    %382 = vmatprep.subr.mxu0 0.0
    %383 = vmatpush1.msra.mxu0 %v126
    %384 = vmatprep.subr.mxu0 0.0
    %385 = vmatpush1.msra.mxu0 %v125
    %386 = vmatprep.subr.mxu0 0.0
    %387 = vmatpush1.msra.mxu0 %v124
    %388 = vmatprep.subr.mxu0 0.0
    %389 = vmatpush1.msra.mxu0 %v123
    %390 = vmatprep.subr.mxu0 0.0
    %391 = vmatpush1.msra.mxu0 %v122
    %392 = vmatprep.subr.mxu0 0.0
    %393 = vmatpush1.msra.mxu0 %v121
    %394 = vmatprep.subr.mxu0 0.0
    %395 = vmatpush1.msra.mxu0 %v120
    %396 = vmatprep.subr.mxu0 0.0
    %397 = vmatpush1.msra.mxu0 %v119
    %398 = vmatprep.subr.mxu0 0.0
    %399 = vmatpush2.msra.mxu0 %v150
    %400 = vmatprep.subr.mxu0 0.0
    %401 = vmatpush2.msra.mxu0 %v149
    %402 = vmatprep.subr.mxu0 0.0
    %403 = vmatpush2.msra.mxu0 %v148
    %404 = vmatprep.subr.mxu0 0.0
    %405 = vmatpush2.msra.mxu0 %v147
    %406 = vmatprep.subr.mxu0 0.0
    %407 = vmatpush2.msra.mxu0 %v146
    %408 = vmatprep.subr.mxu0 0.0
    %409 = vmatpush2.msra.mxu0 %v145
    %410 = vmatprep.subr.mxu0 0.0
    %411 = vmatpush2.msra.mxu0 %v144
    %412 = vmatprep.subr.mxu0 0.0
    %413 = vmatpush2.msra.mxu0 %v143
    %414 = vmatprep.subr.mxu0 0.0
    %415 = vmatpush2.msra.mxu0 %v142
    %416 = vmatprep.subr.mxu0 0.0
    %417 = vmatpush2.msra.mxu0 %v141
    %418 = vmatprep.subr.mxu0 0.0
    %419 = vmatpush2.msra.mxu0 %v140
    %420 = vmatprep.subr.mxu0 0.0
    %421 = vmatpush2.msra.mxu0 %v139
    %422 = vmatprep.subr.mxu0 0.0
    %423 = vmatpush2.msra.mxu0 %v138
    %424 = vmatprep.subr.mxu0 0.0
    %425 = vmatpush2.msra.mxu0 %v137
    %426 = vmatprep.subr.mxu0 0.0
    %427 = vmatpush2.msra.mxu0 %v136
    %428 = vmatprep.subr.mxu0 0.0
    %429 = vmatpush2.msra.mxu0 %v135
    %430 = vmatprep.mubr.f32.mxu0 %v22
    %431 = vmatmul.mubr.f32.gmra.mxu0 %v21
    %v432 = vpop.f32.mrf.mxu0
    %v433 = vadd.f32 %v363, %v432
    %v434 = vpop.f32.mrf.mxu0
    %435 = vdwg.mxu0
    %v436 = vsub.f32 0.0, %v433
    %v437 = vmul.f32 %v436, 1.442695
    %v438 = vpow.pop %v437
    %v439 = vadd.f32 %v438, 1.0
    %v440 = vrcp.pop %v439
    %v441 = vld [vmem:[%s2] sm:$0xff]
    %v442 = vld [vmem:[%s2 + $0x8] sm:$0xff]
    %v443 = vld [vmem:[%s2 + $0x10] sm:$0xff]
    %v444 = vld [vmem:[%s2 + $0x18] sm:$0xff]
    %v445 = vld [vmem:[%s2 + $0x20] sm:$0xff]
    %v446 = vld [vmem:[%s2 + $0x28] sm:$0xff]
    %v447 = vld [vmem:[%s2 + $0x30] sm:$0xff]
    %v448 = vld [vmem:[%s2 + $0x38] sm:$0xff]
    %v449 = vld [vmem:[%s2 + $0x40] sm:$0x1]
    %v450 = vlaneseq
    %v451 = vshrl.u32 %v450, 7
    %v452 = vsub.s32 0, %v451
    %v453 = vrot.slane %v449, %v452
    %vm454 = vcmask 523264
    %v456 = vsel %vm454, %v440, 0
    %458 = vmatprep.subr.mxu0 0.0
    %459 = vmatpush1.msra.mxu0 0.0
    %460 = vmatprep.subr.mxu0 0.0
    %461 = vmatpush1.msra.mxu0 0.0
    %462 = vmatprep.subr.mxu0 0.0
    %463 = vmatpush1.msra.mxu0 0.0
    %464 = vmatprep.subr.mxu0 0.0
    %465 = vmatpush1.msra.mxu0 0.0
    %466 = vmatprep.subr.mxu0 0.0
    %467 = vmatpush1.msra.mxu0 0.0
    %468 = vmatprep.subr.mxu0 0.0
    %469 = vmatpush1.msra.mxu0 0.0
    %470 = vmatprep.subr.mxu0 0.0
    %471 = vmatpush1.msra.mxu0 0.0
    %472 = vmatprep.subr.mxu0 0.0
    %473 = vmatpush1.msra.mxu0 0.0
    %474 = vmatprep.subr.mxu0 0.0
    %475 = vmatpush1.msra.mxu0 %v448
    %476 = vmatprep.subr.mxu0 0.0
    %477 = vmatpush1.msra.mxu0 %v447
    %478 = vmatprep.subr.mxu0 0.0
    %479 = vmatpush1.msra.mxu0 %v446
    %480 = vmatprep.subr.mxu0 0.0
    %481 = vmatpush1.msra.mxu0 %v445
    %482 = vmatprep.subr.mxu0 0.0
    %483 = vmatpush1.msra.mxu0 %v444
    %484 = vmatprep.subr.mxu0 0.0
    %485 = vmatpush1.msra.mxu0 %v443
    %486 = vmatprep.subr.mxu0 0.0
    %487 = vmatpush1.msra.mxu0 %v442
    %488 = vmatprep.subr.mxu0 0.0
    %489 = vmatpush1.msra.mxu0 %v441
    %490 = vmatprep.subr.mxu0 0.0
    %491 = vmatpush2.msra.mxu0 0.0
    %492 = vmatprep.subr.mxu0 0.0
    %493 = vmatpush2.msra.mxu0 0.0
    %494 = vmatprep.subr.mxu0 0.0
    %495 = vmatpush2.msra.mxu0 0.0
    %496 = vmatprep.subr.mxu0 0.0
    %497 = vmatpush2.msra.mxu0 0.0
    %498 = vmatprep.subr.mxu0 0.0
    %499 = vmatpush2.msra.mxu0 0.0
    %500 = vmatprep.subr.mxu0 0.0
    %501 = vmatpush2.msra.mxu0 0.0
    %502 = vmatprep.subr.mxu0 0.0
    %503 = vmatpush2.msra.mxu0 0.0
    %504 = vmatprep.subr.mxu0 0.0
    %505 = vmatpush2.msra.mxu0 0.0
    %506 = vmatprep.subr.mxu0 0.0
    %507 = vmatpush2.msra.mxu0 0.0
    %508 = vmatprep.subr.mxu0 0.0
    %509 = vmatpush2.msra.mxu0 0.0
    %510 = vmatprep.subr.mxu0 0.0
    %511 = vmatpush2.msra.mxu0 0.0
    %512 = vmatprep.subr.mxu0 0.0
    %513 = vmatpush2.msra.mxu0 0.0
    %514 = vmatprep.subr.mxu0 0.0
    %515 = vmatpush2.msra.mxu0 0.0
    %516 = vmatprep.subr.mxu0 0.0
    %517 = vmatpush2.msra.mxu0 0.0
    %518 = vmatprep.subr.mxu0 0.0
    %519 = vmatpush2.msra.mxu0 0.0
    %520 = vmatprep.subr.mxu0 0.0
    %521 = vmatpush2.msra.mxu0 0.0
    %522 = vmatprep.mubr.f32.mxu0 0.0
    %523 = vmatmul.mubr.f32.gmra.mxu0 %v456
    %v524 = vpop.f32.mrf.mxu0
    %v525 = vadd.f32 %v453, %v524
    %v526 = vpop.f32.mrf.mxu0
    %527 = vdwg.mxu0
    %528 = vst [vmem:[#allocation2] sm:$0xff] %v525
    // Predicated region
    $region14: #{tpu_custom_call.1} parent=1 // pred_check
      _
    $region15: #{tpu_custom_call.1} parent=1 // pred_check_branch
      %530 = sbr.rel (0) target = $region17
    $region16: #{tpu_custom_call.1} parent=1 // pred_region
      %s532 = ssub.s32 128, 128
      %533 = vsyncadd [#allocation3], %s532
      %s535 = sshll.u32 [#allocation2], 4
      %s536 = int_to_ptr.vmem [resolvable:$true] %s535
      %538 = dma.vmem_to_hbm [thread:$0]  %s536, 128, %s3, [#allocation3]
    $region17: #{tpu_custom_call.1} parent=1 // pred_fallthru
      _
    // Predicated region
    $region18: #{tpu_custom_call.1} parent=1 // pred_check
      _
    $region19: #{tpu_custom_call.1} parent=1 // pred_check_branch
      %540 = sbr.rel (0) target = $region21
    $region20: #{tpu_custom_call.1} parent=1 // pred_region
      %541 = dma.done [#allocation3], 128
    $region21: #{tpu_custom_call.1} parent=1 // pred_fallthru
      _
    %542 = vsyncpa [#allocation3], 1

</llo_original>
